<compile_context>
chip_gen: v6e
topology: v6e:2x2x1
jax: 0.10.0
libtpu: 0.0.40
codegen_flags: <defaults>
</compile_context>

<pallas_src>
import functools
import math

import jax
import jax.numpy as jnp
from jax.experimental import pallas as pl
from jax.experimental.pallas import tpu as pltpu


def _round_up(n, m):
    return ((n + m - 1) // m) * m


def _cdiv(a, b):
    return -(-a // b)


# ---------------------------------------------------------------------------
# Kernel body: one batch tile through all three layers (bf16 MXU inputs,
# f32 accumulation).
# ---------------------------------------------------------------------------
def _mlp_kernel(x_ref, w1_ref, b1_ref, w2_ref, b2_ref, w3_ref, b3_ref, o_ref,
                *, apply_tanh):
    x = x_ref[...].astype(jnp.bfloat16)            # in-kernel cast (VPU filler)
    # fc1 + ReLU
    h = jnp.dot(x, w1_ref[...], preferred_element_type=jnp.float32)
    h = jnp.maximum(h + b1_ref[...], 0.0)
    # fc2 + ReLU
    h = jnp.dot(h.astype(jnp.bfloat16), w2_ref[...],
                preferred_element_type=jnp.float32)
    h = jnp.maximum(h + b2_ref[...], 0.0)
    # fc3 (+ optional last_activation, e.g. tanh)
    y = jnp.dot(h.astype(jnp.bfloat16), w3_ref[...],
                preferred_element_type=jnp.float32)
    y = y + b3_ref[...]
    if apply_tanh:
        y = jnp.tanh(y)
    o_ref[...] = y.astype(o_ref.dtype)


# ---------------------------------------------------------------------------
# One-time parameter preparation (padding + bf16 cast), done at init time so
# the per-call wrapper does no weight-sized HBM traffic.
# ---------------------------------------------------------------------------
def prepare_params(params):
    """Pad hidden dim to a multiple of 128 and cast weights to bf16 once.

    Raw params use (in_features, out_features) weight layout.  Input dim is
    left at its natural size (full-dim blocks are legal); the output dim is
    only padded when it is already >= 128.  Zero padding is transparent.
    """
    w1, b1 = params["w1"], params["b1"]
    w2, b2 = params["w2"], params["b2"]
    w3, b3 = params["w3"], params["b3"]
    input_dim, hidden_dim = w1.shape
    out_dim = w3.shape[1]

    hid_p = _round_up(hidden_dim, 128)
    out_p = _round_up(out_dim, 128) if out_dim >= 128 else out_dim

    def pad_w(w, rows, cols):
        return jnp.zeros((rows, cols), jnp.bfloat16).at[
            :w.shape[0], :w.shape[1]].set(w.astype(jnp.bfloat16))

    def pad_b(b, cols):
        return jnp.zeros((1, cols), jnp.float32).at[:, :b.shape[1]].set(
            b.astype(jnp.float32))

    return {
        "w1": pad_w(w1, input_dim, hid_p), "b1": pad_b(b1, hid_p),
        "w2": pad_w(w2, hid_p, hid_p),     "b2": pad_b(b2, hid_p),
        "w3": pad_w(w3, hid_p, out_p),     "b3": pad_b(b3, out_p),
        "input_dim": input_dim, "hidden_dim": hidden_dim,
        "out_dim": out_dim, "hid_p": hid_p, "out_p": out_p,
    }


def _choose_batch_tiling(batch, tile_b_max=512):
    """Balanced, megacore-aware batch tiling."""
    if batch <= 8:
        return _round_up(max(batch, 1), 8), 1
    # >= 2 tiles so the "parallel" batch axis can shard across v7x's two TCs;
    # balanced tile size keeps last-tile zero padding small.
    num_tiles = max(2, _cdiv(batch, tile_b_max))
    tile_b = _round_up(_cdiv(batch, num_tiles), 8)
    num_tiles = _cdiv(batch, tile_b)
    return tile_b, num_tiles


# ---------------------------------------------------------------------------
# Forward pass wrapper.
# ---------------------------------------------------------------------------
def nn_model_forward(x, prepared, last_activation=None, tile_b_max=512):
    """Fused forward pass of NNModel.

    x:        (batch, input_dim) float32
    prepared: output of prepare_params() (padded bf16 weights, f32 biases)
    last_activation: None or "tanh"
    """
    w1p, b1p = prepared["w1"], prepared["b1"]
    w2p, b2p = prepared["w2"], prepared["b2"]
    w3p, b3p = prepared["w3"], prepared["b3"]
    input_dim = prepared["input_dim"]
    hid_p, out_p, out_dim = prepared["hid_p"], prepared["out_p"], prepared["out_dim"]

    batch = x.shape[0]
    assert x.shape[1] == input_dim
    tile_b, num_tiles = _choose_batch_tiling(batch, tile_b_max)
    batch_p = tile_b * num_tiles

    xp = x if batch_p == batch else jnp.pad(x, ((0, batch_p - batch), (0, 0)))

    apply_tanh = (last_activation == "tanh")
    kernel = functools.partial(_mlp_kernel, apply_tanh=apply_tanh)

    # Advisory cost hint (weights counted once; on v7x megacore each core
    # re-fetches its copy -- advisory only, no functional impact).
    flops = 2 * batch_p * (input_dim * hid_p + hid_p * hid_p + hid_p * out_p)
    bytes_accessed = (batch_p * input_dim * 4
                      + (w1p.size + w2p.size + w3p.size) * 2
                      + (b1p.size + b2p.size + b3p.size) * 4
                      + batch_p * out_p * 4)
    cost = pl.CostEstimate(
        flops=flops,
        transcendentals=batch_p * out_p if apply_tanh else 0,
        bytes_accessed=bytes_accessed)

    # Explicit VMEM budget: resident weights (+ biases), double-buffered x and
    # out tiles, live f32/bf16 intermediates, plus headroom.
    # TODO(synk): for very large hidden dims (w2 alone > ~VMEM/2 on v7x),
    # K-tile the second matmul instead of keeping all weights resident.
    vmem_bytes = (
        (w1p.size + w2p.size + w3p.size) * 2
        + (b1p.size + b2p.size + b3p.size) * 4
        + 2 * tile_b * input_dim * 4
        + 2 * tile_b * out_p * 4
        + 6 * tile_b * hid_p * 4
        + (8 << 20))
    vmem_bytes = min(max(vmem_bytes, 24 << 20), 64 << 20)

    def run(single_buffer_weights):
        wkw = {"pipeline_mode": pl.Buffered(1)} if single_buffer_weights else {}
        const = lambda i: (0, 0)       # weights/biases resident across grid
        out_padded = pl.pallas_call(
            kernel,
            out_shape=jax.ShapeDtypeStruct((batch_p, out_p), jnp.float32),
            grid=(num_tiles,),
            in_specs=[
                pl.BlockSpec((tile_b, input_dim), lambda i: (i, 0)),  # x streams
                pl.BlockSpec((input_dim, hid_p), const, **wkw),       # w1
                pl.BlockSpec((1, hid_p), const, **wkw),               # b1
                pl.BlockSpec((hid_p, hid_p), const, **wkw),           # w2
                pl.BlockSpec((1, hid_p), const, **wkw),               # b2
                pl.BlockSpec((hid_p, out_p), const, **wkw),           # w3
                pl.BlockSpec((1, out_p), const, **wkw),               # b3
            ],
            out_specs=pl.BlockSpec((tile_b, out_p), lambda i: (i, 0)),
            compiler_params=pltpu.CompilerParams(
                dimension_semantics=("parallel",),
                vmem_limit_bytes=vmem_bytes),
            cost_estimate=cost,
        )(xp, w1p, b1p, w2p, b2p, w3p, b3p)
        return jax.block_until_ready(out_padded)

    try:
        out_padded = run(single_buffer_weights=True)
    except Exception:
        # Fallback if this jax build rejects Buffered(1) for constant blocks.
        out_padded = run(single_buffer_weights=False)

    out = out_padded
    if batch_p != batch:
        out = out[:batch]
    if out_p != out_dim:
        out = out[:, :out_dim]
    return out


# ---------------------------------------------------------------------------
# Init (mirrors the PyTorch module) and pure-JAX reference.
# ---------------------------------------------------------------------------
def init_params(key, input_dim, hidden_dim, output_dim):
    """kaiming_uniform_(nonlinearity='relu') for weights, PyTorch default
    uniform(-1/sqrt(fan_in), 1/sqrt(fan_in)) for biases.
    Weights stored as (in_features, out_features)."""
    def linear(k, fan_in, fan_out):
        kw, kb = jax.random.split(k)
        w_bound = math.sqrt(2.0) * math.sqrt(3.0 / fan_in)
        b_bound = 1.0 / math.sqrt(fan_in)
        w = jax.random.uniform(kw, (fan_in, fan_out), jnp.float32,
                               minval=-w_bound, maxval=w_bound)
        b = jax.random.uniform(kb, (1, fan_out), jnp.float32,
                               minval=-b_bound, maxval=b_bound)
        return w, b

    k1, k2, k3 = jax.random.split(key, 3)
    w1, b1 = linear(k1, input_dim, hidden_dim)
    w2, b2 = linear(k2, hidden_dim, hidden_dim)
    w3, b3 = linear(k3, hidden_dim, output_dim)
    return {"w1": w1, "b1": b1, "w2": w2, "b2": b2, "w3": w3, "b3": b3}


def _reference_forward(x, p, last_activation=None, bf16=True):
    """Pure-JAX reference; bf16=True mimics the kernel's bf16 MXU inputs."""
    def mm(a, b):
        if bf16:
            return jnp.dot(a.astype(jnp.bfloat16), b.astype(jnp.bfloat16),
                           preferred_element_type=jnp.float32)
        return jnp.dot(a, b)
    h = jnp.maximum(mm(x, p["w1"]) + p["b1"], 0.0)
    h = jnp.maximum(mm(h, p["w2"]) + p["b2"], 0.0)
    y = mm(h, p["w3"]) + p["b3"]
    if last_activation == "tanh":
        y = jnp.tanh(y)
    return y


if __name__ == "__main__":
    key = jax.random.PRNGKey(0)
    k_param, k_x, k_x2 = jax.random.split(key, 3)

    batch, input_dim, hidden_dim, output_dim = 8, 16, 32, 8
    params = init_params(k_param, input_dim, hidden_dim, output_dim)
    prepared = prepare_params(params)   # one-time pad + bf16 cast (init-time)
    x = jax.random.normal(k_x, (batch, input_dim), jnp.float32)

    # default path (identity last activation)
    out = jax.block_until_ready(nn_model_forward(x, prepared, last_activation=None))
    ref = _reference_forward(x, params, last_activation=None, bf16=True)
    assert out.shape == (batch, output_dim)
    assert jnp.allclose(out, ref, atol=2e-2, rtol=2e-2)
    # loose sanity check against the pure-f32 reference (bf16 MXU inputs)
    ref_f32 = _reference_forward(x, params, last_activation=None, bf16=False)
    assert jnp.allclose(out, ref_f32, atol=1e-1, rtol=1e-1)

    # tanh last-activation path
    out_t = jax.block_until_ready(nn_model_forward(x, prepared, last_activation="tanh"))
    ref_t = _reference_forward(x, params, last_activation="tanh", bf16=True)
    assert jnp.allclose(out_t, ref_t, atol=2e-2, rtol=2e-2)

    # non-divisible batch: exercises batch zero-padding + 2-tile (megacore) grid
    x2 = jax.random.normal(k_x2, (20, input_dim), jnp.float32)
    out2 = jax.block_until_ready(nn_model_forward(x2, prepared, last_activation=None))
    ref2 = _reference_forward(x2, params, last_activation=None, bf16=True)
    assert out2.shape == (20, output_dim)
    assert jnp.allclose(out2, ref2, atol=2e-2, rtol=2e-2)

    print("KERNEL_OK")
</pallas_src>

<mosaic_0001>
module attributes {stable_mosaic.version = 11 : i64} {
  func.func @_mlp_kernel(%arg0: i32, %arg1: memref<8x16xf32, #tpu.memory_space<vmem>>, %arg2: memref<16x128xbf16, #tpu.memory_space<vmem>>, %arg3: memref<1x128xf32, #tpu.memory_space<vmem>>, %arg4: memref<128x128xbf16, #tpu.memory_space<vmem>>, %arg5: memref<1x128xf32, #tpu.memory_space<vmem>>, %arg6: memref<128x8xbf16, #tpu.memory_space<vmem>>, %arg7: memref<1x8xf32, #tpu.memory_space<vmem>>, %arg8: memref<8x8xf32, #tpu.memory_space<vmem>>) attributes {dimension_semantics = [#tpu.dimension_semantics<parallel>], iteration_bounds = array<i64: 1>, scalar_prefetch = 0 : i64, scratch_operands = 0 : i64, tpu.core_type = #tpu.core_type<tc>, window_params = [{transform_indices = @transform_0, window_bounds = array<i64: 8, 16>}, {pipeline_mode = #tpu.pipeline_mode<synchronous>, transform_indices = @transform_1, window_bounds = array<i64: 16, 128>}, {pipeline_mode = #tpu.pipeline_mode<synchronous>, transform_indices = @transform_2, window_bounds = array<i64: 1, 128>}, {pipeline_mode = #tpu.pipeline_mode<synchronous>, transform_indices = @transform_3, window_bounds = array<i64: 128, 128>}, {pipeline_mode = #tpu.pipeline_mode<synchronous>, transform_indices = @transform_4, window_bounds = array<i64: 1, 128>}, {pipeline_mode = #tpu.pipeline_mode<synchronous>, transform_indices = @transform_5, window_bounds = array<i64: 128, 8>}, {pipeline_mode = #tpu.pipeline_mode<synchronous>, transform_indices = @transform_6, window_bounds = array<i64: 1, 8>}, {transform_indices = @transform_7, window_bounds = array<i64: 8, 8>}]} {
    %c0 = arith.constant 0 : index
    %c0_0 = arith.constant 0 : index
    %0 = vector.load %arg1[%c0, %c0_0] : memref<8x16xf32, #tpu.memory_space<vmem>>, vector<8x16xf32>
    %1 = arith.truncf %0 : vector<8x16xf32> to vector<8x16xbf16>
    %c0_1 = arith.constant 0 : index
    %c0_2 = arith.constant 0 : index
    %2 = vector.load %arg2[%c0_1, %c0_2] : memref<16x128xbf16, #tpu.memory_space<vmem>>, vector<16x128xbf16>
    %cst = arith.constant dense<0.000000e+00> : vector<8x128xf32>
    %3 = tpu.matmul %1, %2, %cst {dimension_numbers = #tpu.dot_dimension_numbers<[1], [0], [0], [1], [0, 0, 1, 1], [], []>} : vector<8x16xbf16>, vector<16x128xbf16>, vector<8x128xf32> -> vector<8x128xf32>
    %c0_3 = arith.constant 0 : index
    %c0_4 = arith.constant 0 : index
    %4 = vector.load %arg3[%c0_3, %c0_4] : memref<1x128xf32, #tpu.memory_space<vmem>>, vector<1x128xf32>
    %5 = vector.broadcast %4 : vector<1x128xf32> to vector<8x128xf32>
    %6 = arith.addf %3, %5 : vector<8x128xf32>
    %cst_5 = arith.constant 0.000000e+00 : f32
    %7 = vector.broadcast %cst_5 : f32 to vector<8x128xf32>
    %8 = arith.maximumf %6, %7 : vector<8x128xf32>
    %9 = arith.truncf %8 : vector<8x128xf32> to vector<8x128xbf16>
    %c0_6 = arith.constant 0 : index
    %c0_7 = arith.constant 0 : index
    %10 = vector.load %arg4[%c0_6, %c0_7] : memref<128x128xbf16, #tpu.memory_space<vmem>>, vector<128x128xbf16>
    %cst_8 = arith.constant dense<0.000000e+00> : vector<8x128xf32>
    %11 = tpu.matmul %9, %10, %cst_8 {dimension_numbers = #tpu.dot_dimension_numbers<[1], [0], [0], [1], [0, 0, 1, 1], [], []>} : vector<8x128xbf16>, vector<128x128xbf16>, vector<8x128xf32> -> vector<8x128xf32>
    %c0_9 = arith.constant 0 : index
    %c0_10 = arith.constant 0 : index
    %12 = vector.load %arg5[%c0_9, %c0_10] : memref<1x128xf32, #tpu.memory_space<vmem>>, vector<1x128xf32>
    %13 = vector.broadcast %12 : vector<1x128xf32> to vector<8x128xf32>
    %14 = arith.addf %11, %13 : vector<8x128xf32>
    %cst_11 = arith.constant 0.000000e+00 : f32
    %15 = vector.broadcast %cst_11 : f32 to vector<8x128xf32>
    %16 = arith.maximumf %14, %15 : vector<8x128xf32>
    %17 = arith.truncf %16 : vector<8x128xf32> to vector<8x128xbf16>
    %c0_12 = arith.constant 0 : index
    %c0_13 = arith.constant 0 : index
    %18 = vector.load %arg6[%c0_12, %c0_13] : memref<128x8xbf16, #tpu.memory_space<vmem>>, vector<128x8xbf16>
    %cst_14 = arith.constant dense<0.000000e+00> : vector<8x8xf32>
    %19 = tpu.matmul %17, %18, %cst_14 {dimension_numbers = #tpu.dot_dimension_numbers<[1], [0], [0], [1], [0, 0, 1, 1], [], []>} : vector<8x128xbf16>, vector<128x8xbf16>, vector<8x8xf32> -> vector<8x8xf32>
    %c0_15 = arith.constant 0 : index
    %c0_16 = arith.constant 0 : index
    %20 = vector.load %arg7[%c0_15, %c0_16] : memref<1x8xf32, #tpu.memory_space<vmem>>, vector<1x8xf32>
    %21 = vector.broadcast %20 : vector<1x8xf32> to vector<8x8xf32>
    %22 = arith.addf %19, %21 : vector<8x8xf32>
    %c0_17 = arith.constant 0 : index
    %c0_18 = arith.constant 0 : index
    %23 = vector.load %arg8[%c0_17, %c0_18] : memref<8x8xf32, #tpu.memory_space<vmem>>, vector<8x8xf32>
    tpu.vector_store %arg8[%c0_17, %c0_18], %22 {strides = array<i32>} : memref<8x8xf32, #tpu.memory_space<vmem>>, vector<8x8xf32>,
    return
  }
  func.func @transform_0(%arg0: i32) -> (i32, i32) {
    %c0_i32 = arith.constant 0 : i32
    %c0_i32_0 = arith.constant 0 : i32
    return %arg0, %c0_i32 : i32, i32
  }
  func.func @transform_1(%arg0: i32) -> (i32, i32) {
    %c0_i32 = arith.constant 0 : i32
    %c0_i32_0 = arith.constant 0 : i32
    %c0_i32_1 = arith.constant 0 : i32
    return %c0_i32, %c0_i32_0 : i32, i32
  }
  func.func @transform_2(%arg0: i32) -> (i32, i32) {
    %c0_i32 = arith.constant 0 : i32
    %c0_i32_0 = arith.constant 0 : i32
    %c0_i32_1 = arith.constant 0 : i32
    return %c0_i32, %c0_i32_0 : i32, i32
  }
  func.func @transform_3(%arg0: i32) -> (i32, i32) {
    %c0_i32 = arith.constant 0 : i32
    %c0_i32_0 = arith.constant 0 : i32
    %c0_i32_1 = arith.constant 0 : i32
    return %c0_i32, %c0_i32_0 : i32, i32
  }
  func.func @transform_4(%arg0: i32) -> (i32, i32) {
    %c0_i32 = arith.constant 0 : i32
    %c0_i32_0 = arith.constant 0 : i32
    %c0_i32_1 = arith.constant 0 : i32
    return %c0_i32, %c0_i32_0 : i32, i32
  }
  func.func @transform_5(%arg0: i32) -> (i32, i32) {
    %c0_i32 = arith.constant 0 : i32
    %c0_i32_0 = arith.constant 0 : i32
    %c0_i32_1 = arith.constant 0 : i32
    return %c0_i32, %c0_i32_0 : i32, i32
  }
  func.func @transform_6(%arg0: i32) -> (i32, i32) {
    %c0_i32 = arith.constant 0 : i32
    %c0_i32_0 = arith.constant 0 : i32
    %c0_i32_1 = arith.constant 0 : i32
    return %c0_i32, %c0_i32_0 : i32, i32
  }
  func.func @transform_7(%arg0: i32) -> (i32, i32) {
    %c0_i32 = arith.constant 0 : i32
    %c0_i32_0 = arith.constant 0 : i32
    return %arg0, %c0_i32 : i32, i32
  }
}

module attributes {stable_mosaic.version = 11 : i64} {
  func.func @_mlp_kernel(%arg0: i32, %arg1: memref<8x16xf32, #tpu.memory_space<vmem>>, %arg2: memref<16x128xbf16, #tpu.memory_space<vmem>>, %arg3: memref<1x128xf32, #tpu.memory_space<vmem>>, %arg4: memref<128x128xbf16, #tpu.memory_space<vmem>>, %arg5: memref<1x128xf32, #tpu.memory_space<vmem>>, %arg6: memref<128x8xbf16, #tpu.memory_space<vmem>>, %arg7: memref<1x8xf32, #tpu.memory_space<vmem>>, %arg8: memref<8x8xf32, #tpu.memory_space<vmem>>) attributes {dimension_semantics = [#tpu.dimension_semantics<parallel>], iteration_bounds = array<i64: 1>, scalar_prefetch = 0 : i64, scratch_operands = 0 : i64, tpu.core_type = #tpu.core_type<tc>, window_params = [{transform_indices = @transform_0, window_bounds = array<i64: 8, 16>}, {pipeline_mode = #tpu.pipeline_mode<synchronous>, transform_indices = @transform_1, window_bounds = array<i64: 16, 128>}, {pipeline_mode = #tpu.pipeline_mode<synchronous>, transform_indices = @transform_2, window_bounds = array<i64: 1, 128>}, {pipeline_mode = #tpu.pipeline_mode<synchronous>, transform_indices = @transform_3, window_bounds = array<i64: 128, 128>}, {pipeline_mode = #tpu.pipeline_mode<synchronous>, transform_indices = @transform_4, window_bounds = array<i64: 1, 128>}, {pipeline_mode = #tpu.pipeline_mode<synchronous>, transform_indices = @transform_5, window_bounds = array<i64: 128, 8>}, {pipeline_mode = #tpu.pipeline_mode<synchronous>, transform_indices = @transform_6, window_bounds = array<i64: 1, 8>}, {transform_indices = @transform_7, window_bounds = array<i64: 8, 8>}]} {
    %c0 = arith.constant 0 : index
    %c0_0 = arith.constant 0 : index
    %0 = vector.load %arg1[%c0, %c0_0] : memref<8x16xf32, #tpu.memory_space<vmem>>, vector<8x16xf32>
    %1 = arith.truncf %0 : vector<8x16xf32> to vector<8x16xbf16>
    %c0_1 = arith.constant 0 : index
    %c0_2 = arith.constant 0 : index
    %2 = vector.load %arg2[%c0_1, %c0_2] : memref<16x128xbf16, #tpu.memory_space<vmem>>, vector<16x128xbf16>
    %cst = arith.constant dense<0.000000e+00> : vector<8x128xf32>
    %3 = tpu.matmul %1, %2, %cst {dimension_numbers = #tpu.dot_dimension_numbers<[1], [0], [0], [1], [0, 0, 1, 1], [], []>} : vector<8x16xbf16>, vector<16x128xbf16>, vector<8x128xf32> -> vector<8x128xf32>
    %c0_3 = arith.constant 0 : index
    %c0_4 = arith.constant 0 : index
    %4 = vector.load %arg3[%c0_3, %c0_4] : memref<1x128xf32, #tpu.memory_space<vmem>>, vector<1x128xf32>
    %5 = vector.broadcast %4 : vector<1x128xf32> to vector<8x128xf32>
    %6 = arith.addf %3, %5 : vector<8x128xf32>
    %cst_5 = arith.constant 0.000000e+00 : f32
    %7 = vector.broadcast %cst_5 : f32 to vector<8x128xf32>
    %8 = arith.maximumf %6, %7 : vector<8x128xf32>
    %9 = arith.truncf %8 : vector<8x128xf32> to vector<8x128xbf16>
    %c0_6 = arith.constant 0 : index
    %c0_7 = arith.constant 0 : index
    %10 = vector.load %arg4[%c0_6, %c0_7] : memref<128x128xbf16, #tpu.memory_space<vmem>>, vector<128x128xbf16>
    %cst_8 = arith.constant dense<0.000000e+00> : vector<8x128xf32>
    %11 = tpu.matmul %9, %10, %cst_8 {dimension_numbers = #tpu.dot_dimension_numbers<[1], [0], [0], [1], [0, 0, 1, 1], [], []>} : vector<8x128xbf16>, vector<128x128xbf16>, vector<8x128xf32> -> vector<8x128xf32>
    %c0_9 = arith.constant 0 : index
    %c0_10 = arith.constant 0 : index
    %12 = vector.load %arg5[%c0_9, %c0_10] : memref<1x128xf32, #tpu.memory_space<vmem>>, vector<1x128xf32>
    %13 = vector.broadcast %12 : vector<1x128xf32> to vector<8x128xf32>
    %14 = arith.addf %11, %13 : vector<8x128xf32>
    %cst_11 = arith.constant 0.000000e+00 : f32
    %15 = vector.broadcast %cst_11 : f32 to vector<8x128xf32>
    %16 = arith.maximumf %14, %15 : vector<8x128xf32>
    %17 = arith.truncf %16 : vector<8x128xf32> to vector<8x128xbf16>
    %c0_12 = arith.constant 0 : index
    %c0_13 = arith.constant 0 : index
    %18 = vector.load %arg6[%c0_12, %c0_13] : memref<128x8xbf16, #tpu.memory_space<vmem>>, vector<128x8xbf16>
    %cst_14 = arith.constant dense<0.000000e+00> : vector<8x8xf32>
    %19 = tpu.matmul %17, %18, %cst_14 {dimension_numbers = #tpu.dot_dimension_numbers<[1], [0], [0], [1], [0, 0, 1, 1], [], []>} : vector<8x128xbf16>, vector<128x8xbf16>, vector<8x8xf32> -> vector<8x8xf32>
    %c0_15 = arith.constant 0 : index
    %c0_16 = arith.constant 0 : index
    %20 = vector.load %arg7[%c0_15, %c0_16] : memref<1x8xf32, #tpu.memory_space<vmem>>, vector<1x8xf32>
    %21 = vector.broadcast %20 : vector<1x8xf32> to vector<8x8xf32>
    %22 = arith.addf %19, %21 : vector<8x8xf32>
    %c0_17 = arith.constant 0 : index
    %c0_18 = arith.constant 0 : index
    %23 = vector.load %arg8[%c0_17, %c0_18] : memref<8x8xf32, #tpu.memory_space<vmem>>, vector<8x8xf32>
    tpu.vector_store %arg8[%c0_17, %c0_18], %22 {strides = array<i32>} : memref<8x8xf32, #tpu.memory_space<vmem>>, vector<8x8xf32>,
    return
  }
  func.func @transform_0(%arg0: i32) -> (i32, i32) {
    %c0_i32 = arith.constant 0 : i32
    %c0_i32_0 = arith.constant 0 : i32
    return %arg0, %c0_i32 : i32, i32
  }
  func.func @transform_1(%arg0: i32) -> (i32, i32) {
    %c0_i32 = arith.constant 0 : i32
    %c0_i32_0 = arith.constant 0 : i32
    %c0_i32_1 = arith.constant 0 : i32
    return %c0_i32, %c0_i32_0 : i32, i32
  }
  func.func @transform_2(%arg0: i32) -> (i32, i32) {
    %c0_i32 = arith.constant 0 : i32
    %c0_i32_0 = arith.constant 0 : i32
    %c0_i32_1 = arith.constant 0 : i32
    return %c0_i32, %c0_i32_0 : i32, i32
  }
  func.func @transform_3(%arg0: i32) -> (i32, i32) {
    %c0_i32 = arith.constant 0 : i32
    %c0_i32_0 = arith.constant 0 : i32
    %c0_i32_1 = arith.constant 0 : i32
    return %c0_i32, %c0_i32_0 : i32, i32
  }
  func.func @transform_4(%arg0: i32) -> (i32, i32) {
    %c0_i32 = arith.constant 0 : i32
    %c0_i32_0 = arith.constant 0 : i32
    %c0_i32_1 = arith.constant 0 : i32
    return %c0_i32, %c0_i32_0 : i32, i32
  }
  func.func @transform_5(%arg0: i32) -> (i32, i32) {
    %c0_i32 = arith.constant 0 : i32
    %c0_i32_0 = arith.constant 0 : i32
    %c0_i32_1 = arith.constant 0 : i32
    return %c0_i32, %c0_i32_0 : i32, i32
  }
  func.func @transform_6(%arg0: i32) -> (i32, i32) {
    %c0_i32 = arith.constant 0 : i32
    %c0_i32_0 = arith.constant 0 : i32
    %c0_i32_1 = arith.constant 0 : i32
    return %c0_i32, %c0_i32_0 : i32, i32
  }
  func.func @transform_7(%arg0: i32) -> (i32, i32) {
    %c0_i32 = arith.constant 0 : i32
    %c0_i32_0 = arith.constant 0 : i32
    return %arg0, %c0_i32 : i32, i32
  }
}

</mosaic_0001>

<llo_original>
// kernel: tpu_custom_call.1
$region0: #{tpu_custom_call.1}
  #allocation0 [shape = 'u32[]', space=smem, size = 0x4, offset = 0x4, fixed_abs, tag = 'smem constant byte address 0x4 - core index']
  #allocation1 [shape = 'u32[144,128]{1,0:T(1,128)}', space=vmem, size = 0x12000, scoped, tag = 'internal scratch']
  %s0 = inlined_call_operand.vmem [shape: f32[8,16], index: 0, kind: input, shape index: {}]
  %s1 = inlined_call_operand.hbm [shape: bf16[16,128], index: 1, kind: input, shape index: {}]
  %s2 = inlined_call_operand.vmem [shape: f32[1,128], index: 2, kind: input, shape index: {}]
  %s3 = inlined_call_operand.vmem [shape: bf16[128,128], index: 3, kind: input, shape index: {}]
  %s4 = inlined_call_operand.hbm [shape: f32[1,128], index: 4, kind: input, shape index: {}]
  %s5 = inlined_call_operand.vmem [shape: bf16[128,8], index: 5, kind: input, shape index: {}]
  %s6 = inlined_call_operand.vmem [shape: f32[1,8], index: 6, kind: input, shape index: {}]
  %s7 = inlined_call_operand.hbm [shape: f32[8,8], index: 7, kind: output, shape index: {}]
  %s8 = sld [smem:[#allocation0]]
  $region46: #{tpu_custom_call.1} parent=0
    _
  %s10 = ssub.s32 1, %s8
  %s11 = scalar_select 0, %s10, %s8
  $region1: #{tpu_custom_call.1} parent=0
    #allocation2 [shape = 'u8[4096]{0}', space=vmem, size = 0x1000, scoped, tag = 'input window, operand 1, single buffered']
    #allocation3 [shape = 's32[1]{0}', space=sflag, size = 0x4, scoped, tag = 'scoped memory for tpu_custom_call.1']
    #allocation4 [shape = 's32[1]{0}', space=sflag, size = 0x4, scoped, tag = 'scoped memory for tpu_custom_call.1']
    #allocation5 [shape = 'u8[512]{0}', space=vmem, size = 0x400, scoped, tag = 'input window, operand 4, single buffered']
    #allocation6 [shape = 's32[1]{0}', space=sflag, size = 0x4, scoped, tag = 'scoped memory for tpu_custom_call.1']
    #allocation7 [shape = 'u8[4096]{0}', space=vmem, size = 0x1000, scoped, tag = 'output window, operand 0, single buffered']
    %12 = vsyncpa [#allocation3], 0
    %13 = vsyncpa [#allocation6], 0
    %14 = vsyncpa [#allocation4], 0
    // Predicated region
    $region2: #{tpu_custom_call.1} parent=1 // pred_check
      _
    $region3: #{tpu_custom_call.1} parent=1 // pred_check_branch
      %16 = sbr.rel (0) target = $region5
    $region4: #{tpu_custom_call.1} parent=1 // pred_region
      _
    $region5: #{tpu_custom_call.1} parent=1 // pred_fallthru
      _
    // Predicated region
    $region6: #{tpu_custom_call.1} parent=1 // pred_check
      _
    $region7: #{tpu_custom_call.1} parent=1 // pred_check_branch
      %18 = sbr.rel (0) target = $region9
    $region8: #{tpu_custom_call.1} parent=1 // pred_region
      %s20 = ssub.s32 128, 128
      %21 = vsyncadd [#allocation3], %s20
      %s22 = sshll.u32 [#allocation2], 4
      %s23 = int_to_ptr.vmem [resolvable:$true] %s22
      %28 = dma.hbm_to_vmem [thread:$0]  %s1, 128, %s23, [#allocation3], 64, 64, 4
    $region9: #{tpu_custom_call.1} parent=1 // pred_fallthru
      _
    // Predicated region
    $region10: #{tpu_custom_call.1} parent=1 // pred_check
      _
    $region11: #{tpu_custom_call.1} parent=1 // pred_check_branch
      %30 = sbr.rel (0) target = $region13
    $region12: #{tpu_custom_call.1} parent=1 // pred_region
      _
    $region13: #{tpu_custom_call.1} parent=1 // pred_fallthru
      _
    // Predicated region
    $region14: #{tpu_custom_call.1} parent=1 // pred_check
      _
    $region15: #{tpu_custom_call.1} parent=1 // pred_check_branch
      %32 = sbr.rel (0) target = $region17
    $region16: #{tpu_custom_call.1} parent=1 // pred_region
      _
    $region17: #{tpu_custom_call.1} parent=1 // pred_fallthru
      _
    // Predicated region
    $region18: #{tpu_custom_call.1} parent=1 // pred_check
      _
    $region19: #{tpu_custom_call.1} parent=1 // pred_check_branch
      %34 = sbr.rel (0) target = $region21
    $region20: #{tpu_custom_call.1} parent=1 // pred_region
      %s36 = ssub.s32 16, 16
      %37 = vsyncadd [#allocation6], %s36
      %s39 = sshll.u32 [#allocation5], 4
      %s40 = int_to_ptr.vmem [resolvable:$true] %s39
      %42 = dma.hbm_to_vmem [thread:$0]  %s4, 16, %s40, [#allocation6]
    $region21: #{tpu_custom_call.1} parent=1 // pred_fallthru
      _
    // Predicated region
    $region22: #{tpu_custom_call.1} parent=1 // pred_check
      _
    $region23: #{tpu_custom_call.1} parent=1 // pred_check_branch
      %44 = sbr.rel (0) target = $region25
    $region24: #{tpu_custom_call.1} parent=1 // pred_region
      _
    $region25: #{tpu_custom_call.1} parent=1 // pred_fallthru
      _
    // Predicated region
    $region26: #{tpu_custom_call.1} parent=1 // pred_check
      _
    $region27: #{tpu_custom_call.1} parent=1 // pred_check_branch
      %46 = sbr.rel (0) target = $region29
    $region28: #{tpu_custom_call.1} parent=1 // pred_region
      _
    $region29: #{tpu_custom_call.1} parent=1 // pred_fallthru
      _
    // Predicated region
    $region30: #{tpu_custom_call.1} parent=1 // pred_check
      _
    $region31: #{tpu_custom_call.1} parent=1 // pred_check_branch
      %48 = sbr.rel (0) target = $region33
    $region32: #{tpu_custom_call.1} parent=1 // pred_region
      %49 = dma.done [#allocation3], 128
    $region33: #{tpu_custom_call.1} parent=1 // pred_fallthru
      _
    // Predicated region
    $region34: #{tpu_custom_call.1} parent=1 // pred_check
      _
    $region35: #{tpu_custom_call.1} parent=1 // pred_check_branch
      %51 = sbr.rel (0) target = $region37
    $region36: #{tpu_custom_call.1} parent=1 // pred_region
      %52 = dma.done [#allocation6], 16
    $region37: #{tpu_custom_call.1} parent=1 // pred_fallthru
      _
    %v54 = vld [vmem:[%s0] sm:$0xff]
    %v55 = vpack.c.bf16 %v54, %v54
    %v56 = vld [vmem:[#allocation2] sm:$0xf]
    %v57 = vld [vmem:[#allocation2 + $0x4] sm:$0xf]
    %v58 = vld [vmem:[%s2] sm:$0x1]
    %v60 = vlaneseq
    %v61 = vshrl.u32 %v60, 7
    %v62 = vsub.s32 0, %v61
    %v63 = vrot.slane %v58, %v62
    %v67 = vunpack.c.l.b16 %v56
    %v68 = vunpack.c.l.b16 %v57
    %v69 = vpack.c.b16 %v68, %v67
    %vm71 = vcmask 130048
    %v73 = vsel %vm71, %v55, 0
    %75 = vmatprep.subr.bf16.mxu0 0
    %76 = vmatpush1.bf16.msra.mxu0 0
    %77 = vmatprep.subr.bf16.mxu0 0
    %78 = vmatpush1.bf16.msra.mxu0 0
    %79 = vmatprep.subr.bf16.mxu0 0
    %80 = vmatpush1.bf16.msra.mxu0 0
    %81 = vmatprep.subr.bf16.mxu0 0
    %82 = vmatpush1.bf16.msra.mxu0 0
    %83 = vmatprep.subr.bf16.mxu0 0
    %84 = vmatpush1.bf16.msra.mxu0 0
    %85 = vmatprep.subr.bf16.mxu0 0
    %86 = vmatpush1.bf16.msra.mxu0 0
    %87 = vmatprep.subr.bf16.mxu0 0
    %88 = vmatpush1.bf16.msra.mxu0 0
    %89 = vmatprep.subr.bf16.mxu0 0
    %90 = vmatpush1.bf16.msra.mxu0 %v69
    %91 = vmatprep.subr.bf16.mxu0 0
    %92 = vmatpush2.bf16.msra.mxu0 0
    %93 = vmatprep.subr.bf16.mxu0 0
    %94 = vmatpush2.bf16.msra.mxu0 0
    %95 = vmatprep.subr.bf16.mxu0 0
    %96 = vmatpush2.bf16.msra.mxu0 0
    %97 = vmatprep.subr.bf16.mxu0 0
    %98 = vmatpush2.bf16.msra.mxu0 0
    %99 = vmatprep.subr.bf16.mxu0 0
    %100 = vmatpush2.bf16.msra.mxu0 0
    %101 = vmatprep.subr.bf16.mxu0 0
    %102 = vmatpush2.bf16.msra.mxu0 0
    %103 = vmatprep.subr.bf16.mxu0 0
    %104 = vmatpush2.bf16.msra.mxu0 0
    %105 = vmatprep.subr.bf16.mxu0 0
    %106 = vmatpush2.bf16.msra.mxu0 0
    %107 = vmatprep.mubr.bf16.mxu0 0
    %108 = vmatmul.mubr.bf16.gmra.mxu0 %v73
    %v109 = vpop.f32.mrf.mxu0
    %v110 = vadd.f32 %v63, %v109
    %v111 = vpop.f32.mrf.mxu0
    %v112 = vpop.f32.mrf.mxu0
    %v113 = vpop.f32.mrf.mxu0
    %114 = vdwg.mxu0
    %v115 = vmax.f32 %v110, 0.0
    %v116 = vpack.c.bf16 %v115, %v115
    %v117 = vld [vmem:[%s3] sm:$0xf]
    %v118 = vld [vmem:[%s3 + $0x4] sm:$0xf]
    %v119 = vld [vmem:[%s3 + $0x8] sm:$0xf]
    %v120 = vld [vmem:[%s3 + $0xc] sm:$0xf]
    %v121 = vld [vmem:[%s3 + $0x10] sm:$0xf]
    %v122 = vld [vmem:[%s3 + $0x14] sm:$0xf]
    %v123 = vld [vmem:[%s3 + $0x18] sm:$0xf]
    %v124 = vld [vmem:[%s3 + $0x1c] sm:$0xf]
    %v125 = vld [vmem:[%s3 + $0x20] sm:$0xf]
    %v126 = vld [vmem:[%s3 + $0x24] sm:$0xf]
    %v127 = vld [vmem:[%s3 + $0x28] sm:$0xf]
    %v128 = vld [vmem:[%s3 + $0x2c] sm:$0xf]
    %v129 = vld [vmem:[%s3 + $0x30] sm:$0xf]
    %v130 = vld [vmem:[%s3 + $0x34] sm:$0xf]
    %v131 = vld [vmem:[%s3 + $0x38] sm:$0xf]
    %v132 = vld [vmem:[%s3 + $0x3c] sm:$0xf]
    %v133 = vld [vmem:[#allocation5] sm:$0x1]
    %v135 = vlaneseq
    %v136 = vshrl.u32 %v135, 7
    %v137 = vsub.s32 0, %v136
    %v138 = vrot.slane %v133, %v137
    %v156 = vunpack.c.l.b16 %v117
    %v157 = vunpack.c.l.b16 %v118
    %v158 = vunpack.c.l.b16 %v119
    %v159 = vunpack.c.l.b16 %v120
    %v160 = vunpack.c.l.b16 %v121
    %v161 = vunpack.c.l.b16 %v122
    %v162 = vunpack.c.l.b16 %v123
    %v163 = vunpack.c.l.b16 %v124
    %v164 = vunpack.c.l.b16 %v125
    %v165 = vunpack.c.l.b16 %v126
    %v166 = vunpack.c.l.b16 %v127
    %v167 = vunpack.c.l.b16 %v128
    %v168 = vunpack.c.l.b16 %v129
    %v169 = vunpack.c.l.b16 %v130
    %v170 = vunpack.c.l.b16 %v131
    %v171 = vunpack.c.l.b16 %v132
    %v172 = vpack.c.b16 %v157, %v156
    %v173 = vpack.c.b16 %v159, %v158
    %v174 = vpack.c.b16 %v161, %v160
    %v175 = vpack.c.b16 %v163, %v162
    %v176 = vpack.c.b16 %v165, %v164
    %v177 = vpack.c.b16 %v167, %v166
    %v178 = vpack.c.b16 %v169, %v168
    %v179 = vpack.c.b16 %v171, %v170
    %188 = vmatprep.subr.bf16.mxu0 0
    %189 = vmatpush1.bf16.msra.mxu0 %v179
    %190 = vmatprep.subr.bf16.mxu0 0
    %191 = vmatpush1.bf16.msra.mxu0 %v178
    %192 = vmatprep.subr.bf16.mxu0 0
    %193 = vmatpush1.bf16.msra.mxu0 %v177
    %194 = vmatprep.subr.bf16.mxu0 0
    %195 = vmatpush1.bf16.msra.mxu0 %v176
    %196 = vmatprep.subr.bf16.mxu0 0
    %197 = vmatpush1.bf16.msra.mxu0 %v175
    %198 = vmatprep.subr.bf16.mxu0 0
    %199 = vmatpush1.bf16.msra.mxu0 %v174
    %200 = vmatprep.subr.bf16.mxu0 0
    %201 = vmatpush1.bf16.msra.mxu0 %v173
    %202 = vmatprep.subr.bf16.mxu0 0
    %203 = vmatpush1.bf16.msra.mxu0 %v172
    %204 = vmatprep.subr.bf16.mxu0 0
    %205 = vmatpush2.bf16.msra.mxu0 0
    %206 = vmatprep.subr.bf16.mxu0 0
    %207 = vmatpush2.bf16.msra.mxu0 0
    %208 = vmatprep.subr.bf16.mxu0 0
    %209 = vmatpush2.bf16.msra.mxu0 0
    %210 = vmatprep.subr.bf16.mxu0 0
    %211 = vmatpush2.bf16.msra.mxu0 0
    %212 = vmatprep.subr.bf16.mxu0 0
    %213 = vmatpush2.bf16.msra.mxu0 0
    %214 = vmatprep.subr.bf16.mxu0 0
    %215 = vmatpush2.bf16.msra.mxu0 0
    %216 = vmatprep.subr.bf16.mxu0 0
    %217 = vmatpush2.bf16.msra.mxu0 0
    %218 = vmatprep.subr.bf16.mxu0 0
    %219 = vmatpush2.bf16.msra.mxu0 0
    %220 = vmatprep.mubr.bf16.mxu0 0
    %221 = vmatmul.mubr.bf16.gmra.mxu0 %v116
    %v222 = vpop.f32.mrf.mxu0
    %v223 = vadd.f32 %v138, %v222
    %v224 = vpop.f32.mrf.mxu0
    %v225 = vpop.f32.mrf.mxu0
    %v226 = vpop.f32.mrf.mxu0
    %227 = vdwg.mxu0
    %v228 = vmax.f32 %v223, 0.0
    %v229 = vpack.c.bf16 %v228, %v228
    %v230 = vld [vmem:[%s5] sm:$0xf]
    %v231 = vld [vmem:[%s5 + $0x4] sm:$0xf]
    %v232 = vld [vmem:[%s5 + $0x8] sm:$0xf]
    %v233 = vld [vmem:[%s5 + $0xc] sm:$0xf]
    %v234 = vld [vmem:[%s5 + $0x10] sm:$0xf]
    %v235 = vld [vmem:[%s5 + $0x14] sm:$0xf]
    %v236 = vld [vmem:[%s5 + $0x18] sm:$0xf]
    %v237 = vld [vmem:[%s5 + $0x1c] sm:$0xf]
    %v238 = vld [vmem:[%s5 + $0x20] sm:$0xf]
    %v239 = vld [vmem:[%s5 + $0x24] sm:$0xf]
    %v240 = vld [vmem:[%s5 + $0x28] sm:$0xf]
    %v241 = vld [vmem:[%s5 + $0x2c] sm:$0xf]
    %v242 = vld [vmem:[%s5 + $0x30] sm:$0xf]
    %v243 = vld [vmem:[%s5 + $0x34] sm:$0xf]
    %v244 = vld [vmem:[%s5 + $0x38] sm:$0xf]
    %v245 = vld [vmem:[%s5 + $0x3c] sm:$0xf]
    %v246 = vld [vmem:[%s6] sm:$0x1]
    %v248 = vlaneseq
    %v249 = vshrl.u32 %v248, 7
    %v250 = vsub.s32 0, %v249
    %v251 = vrot.slane %v246, %v250
    %v269 = vunpack.c.l.b16 %v230
    %v270 = vunpack.c.l.b16 %v231
    %v271 = vunpack.c.l.b16 %v232
    %v272 = vunpack.c.l.b16 %v233
    %v273 = vunpack.c.l.b16 %v234
    %v274 = vunpack.c.l.b16 %v235
    %v275 = vunpack.c.l.b16 %v236
    %v276 = vunpack.c.l.b16 %v237
    %v277 = vunpack.c.l.b16 %v238
    %v278 = vunpack.c.l.b16 %v239
    %v279 = vunpack.c.l.b16 %v240
    %v280 = vunpack.c.l.b16 %v241
    %v281 = vunpack.c.l.b16 %v242
    %v282 = vunpack.c.l.b16 %v243
    %v283 = vunpack.c.l.b16 %v244
    %v284 = vunpack.c.l.b16 %v245
    %v285 = vpack.c.b16 %v270, %v269
    %v286 = vpack.c.b16 %v272, %v271
    %v287 = vpack.c.b16 %v274, %v273
    %v288 = vpack.c.b16 %v276, %v275
    %v289 = vpack.c.b16 %v278, %v277
    %v290 = vpack.c.b16 %v280, %v279
    %v291 = vpack.c.b16 %v282, %v281
    %v292 = vpack.c.b16 %v284, %v283
    %301 = vmatprep.subr.bf16.mxu0 0
    %302 = vmatpush1.bf16.msra.mxu0 %v292
    %303 = vmatprep.subr.bf16.mxu0 0
    %304 = vmatpush1.bf16.msra.mxu0 %v291
    %305 = vmatprep.subr.bf16.mxu0 0
    %306 = vmatpush1.bf16.msra.mxu0 %v290
    %307 = vmatprep.subr.bf16.mxu0 0
    %308 = vmatpush1.bf16.msra.mxu0 %v289
    %309 = vmatprep.subr.bf16.mxu0 0
    %310 = vmatpush1.bf16.msra.mxu0 %v288
    %311 = vmatprep.subr.bf16.mxu0 0
    %312 = vmatpush1.bf16.msra.mxu0 %v287
    %313 = vmatprep.subr.bf16.mxu0 0
    %314 = vmatpush1.bf16.msra.mxu0 %v286
    %315 = vmatprep.subr.bf16.mxu0 0
    %316 = vmatpush1.bf16.msra.mxu0 %v285
    %317 = vmatprep.subr.bf16.mxu0 0
    %318 = vmatpush2.bf16.msra.mxu0 0
    %319 = vmatprep.subr.bf16.mxu0 0
    %320 = vmatpush2.bf16.msra.mxu0 0
    %321 = vmatprep.subr.bf16.mxu0 0
    %322 = vmatpush2.bf16.msra.mxu0 0
    %323 = vmatprep.subr.bf16.mxu0 0
    %324 = vmatpush2.bf16.msra.mxu0 0
    %325 = vmatprep.subr.bf16.mxu0 0
    %326 = vmatpush2.bf16.msra.mxu0 0
    %327 = vmatprep.subr.bf16.mxu0 0
    %328 = vmatpush2.bf16.msra.mxu0 0
    %329 = vmatprep.subr.bf16.mxu0 0
    %330 = vmatpush2.bf16.msra.mxu0 0
    %331 = vmatprep.subr.bf16.mxu0 0
    %332 = vmatpush2.bf16.msra.mxu0 0
    %333 = vmatprep.mubr.bf16.mxu0 0
    %334 = vmatmul.mubr.bf16.gmra.mxu0 %v229
    %v335 = vpop.f32.mrf.mxu0
    %v336 = vadd.f32 %v251, %v335
    %v337 = vpop.f32.mrf.mxu0
    %v338 = vpop.f32.mrf.mxu0
    %v339 = vpop.f32.mrf.mxu0
    %340 = vdwg.mxu0
    %vm341 = vcmask 64512
    %342 = vst.msk [vmem:[#allocation7] sm:$0xff] %vm341, %v336
    // Predicated region
    $region38: #{tpu_custom_call.1} parent=1 // pred_check
      _
    $region39: #{tpu_custom_call.1} parent=1 // pred_check_branch
      %344 = sbr.rel (0) target = $region41
    $region40: #{tpu_custom_call.1} parent=1 // pred_region
      %s346 = ssub.s32 128, 128
      %347 = vsyncadd [#allocation4], %s346
      %s349 = sshll.u32 [#allocation7], 4
      %s350 = int_to_ptr.vmem [resolvable:$true] %s349
      %352 = dma.vmem_to_hbm [thread:$0]  %s350, 128, %s7, [#allocation4]
    $region41: #{tpu_custom_call.1} parent=1 // pred_fallthru
      _
    // Predicated region
    $region42: #{tpu_custom_call.1} parent=1 // pred_check
      _
    $region43: #{tpu_custom_call.1} parent=1 // pred_check_branch
      %354 = sbr.rel (0) target = $region45
    $region44: #{tpu_custom_call.1} parent=1 // pred_region
      %355 = dma.done [#allocation4], 128
    $region45: #{tpu_custom_call.1} parent=1 // pred_fallthru
      _
    %356 = vsyncpa [#allocation3], 1
    %357 = vsyncpa [#allocation6], 1
    %358 = vsyncpa [#allocation4], 1

// kernel: tpu_custom_call.1
$region0: #{tpu_custom_call.1}
  #allocation0 [shape = 'u32[]', space=smem, size = 0x4, offset = 0x4, fixed_abs, tag = 'smem constant byte address 0x4 - core index']
  #allocation1 [shape = 'u32[144,128]{1,0:T(1,128)}', space=vmem, size = 0x12000, scoped, tag = 'internal scratch']
  %s0 = inlined_call_operand.vmem [shape: f32[8,16], index: 0, kind: input, shape index: {}]
  %s1 = inlined_call_operand.hbm [shape: bf16[16,128], index: 1, kind: input, shape index: {}]
  %s2 = inlined_call_operand.vmem [shape: f32[1,128], index: 2, kind: input, shape index: {}]
  %s3 = inlined_call_operand.vmem [shape: bf16[128,128], index: 3, kind: input, shape index: {}]
  %s4 = inlined_call_operand.hbm [shape: f32[1,128], index: 4, kind: input, shape index: {}]
  %s5 = inlined_call_operand.vmem [shape: bf16[128,8], index: 5, kind: input, shape index: {}]
  %s6 = inlined_call_operand.vmem [shape: f32[1,8], index: 6, kind: input, shape index: {}]
  %s7 = inlined_call_operand.hbm [shape: f32[8,8], index: 7, kind: output, shape index: {}]
  %s8 = sld [smem:[#allocation0]]
  $region46: #{tpu_custom_call.1} parent=0
    _
  %s10 = ssub.s32 1, %s8
  %s11 = scalar_select 0, %s10, %s8
  $region1: #{tpu_custom_call.1} parent=0
    #allocation2 [shape = 'u8[4096]{0}', space=vmem, size = 0x1000, scoped, tag = 'input window, operand 1, single buffered']
    #allocation3 [shape = 's32[1]{0}', space=sflag, size = 0x4, scoped, tag = 'scoped memory for tpu_custom_call.1']
    #allocation4 [shape = 's32[1]{0}', space=sflag, size = 0x4, scoped, tag = 'scoped memory for tpu_custom_call.1']
    #allocation5 [shape = 'u8[512]{0}', space=vmem, size = 0x400, scoped, tag = 'input window, operand 4, single buffered']
    #allocation6 [shape = 's32[1]{0}', space=sflag, size = 0x4, scoped, tag = 'scoped memory for tpu_custom_call.1']
    #allocation7 [shape = 'u8[4096]{0}', space=vmem, size = 0x1000, scoped, tag = 'output window, operand 0, single buffered']
    %12 = vsyncpa [#allocation3], 0
    %13 = vsyncpa [#allocation6], 0
    %14 = vsyncpa [#allocation4], 0
    // Predicated region
    $region2: #{tpu_custom_call.1} parent=1 // pred_check
      _
    $region3: #{tpu_custom_call.1} parent=1 // pred_check_branch
      %16 = sbr.rel (0) target = $region5
    $region4: #{tpu_custom_call.1} parent=1 // pred_region
      _
    $region5: #{tpu_custom_call.1} parent=1 // pred_fallthru
      _
    // Predicated region
    $region6: #{tpu_custom_call.1} parent=1 // pred_check
      _
    $region7: #{tpu_custom_call.1} parent=1 // pred_check_branch
      %18 = sbr.rel (0) target = $region9
    $region8: #{tpu_custom_call.1} parent=1 // pred_region
      %s20 = ssub.s32 128, 128
      %21 = vsyncadd [#allocation3], %s20
      %s22 = sshll.u32 [#allocation2], 4
      %s23 = int_to_ptr.vmem [resolvable:$true] %s22
      %28 = dma.hbm_to_vmem [thread:$0]  %s1, 128, %s23, [#allocation3], 64, 64, 4
    $region9: #{tpu_custom_call.1} parent=1 // pred_fallthru
      _
    // Predicated region
    $region10: #{tpu_custom_call.1} parent=1 // pred_check
      _
    $region11: #{tpu_custom_call.1} parent=1 // pred_check_branch
      %30 = sbr.rel (0) target = $region13
    $region12: #{tpu_custom_call.1} parent=1 // pred_region
      _
    $region13: #{tpu_custom_call.1} parent=1 // pred_fallthru
      _
    // Predicated region
    $region14: #{tpu_custom_call.1} parent=1 // pred_check
      _
    $region15: #{tpu_custom_call.1} parent=1 // pred_check_branch
      %32 = sbr.rel (0) target = $region17
    $region16: #{tpu_custom_call.1} parent=1 // pred_region
      _
    $region17: #{tpu_custom_call.1} parent=1 // pred_fallthru
      _
    // Predicated region
    $region18: #{tpu_custom_call.1} parent=1 // pred_check
      _
    $region19: #{tpu_custom_call.1} parent=1 // pred_check_branch
      %34 = sbr.rel (0) target = $region21
    $region20: #{tpu_custom_call.1} parent=1 // pred_region
      %s36 = ssub.s32 16, 16
      %37 = vsyncadd [#allocation6], %s36
      %s39 = sshll.u32 [#allocation5], 4
      %s40 = int_to_ptr.vmem [resolvable:$true] %s39
      %42 = dma.hbm_to_vmem [thread:$0]  %s4, 16, %s40, [#allocation6]
    $region21: #{tpu_custom_call.1} parent=1 // pred_fallthru
      _
    // Predicated region
    $region22: #{tpu_custom_call.1} parent=1 // pred_check
      _
    $region23: #{tpu_custom_call.1} parent=1 // pred_check_branch
      %44 = sbr.rel (0) target = $region25
    $region24: #{tpu_custom_call.1} parent=1 // pred_region
      _
    $region25: #{tpu_custom_call.1} parent=1 // pred_fallthru
      _
    // Predicated region
    $region26: #{tpu_custom_call.1} parent=1 // pred_check
      _
    $region27: #{tpu_custom_call.1} parent=1 // pred_check_branch
      %46 = sbr.rel (0) target = $region29
    $region28: #{tpu_custom_call.1} parent=1 // pred_region
      _
    $region29: #{tpu_custom_call.1} parent=1 // pred_fallthru
      _
    // Predicated region
    $region30: #{tpu_custom_call.1} parent=1 // pred_check
      _
    $region31: #{tpu_custom_call.1} parent=1 // pred_check_branch
      %48 = sbr.rel (0) target = $region33
    $region32: #{tpu_custom_call.1} parent=1 // pred_region
      %49 = dma.done [#allocation3], 128
    $region33: #{tpu_custom_call.1} parent=1 // pred_fallthru
      _
    // Predicated region
    $region34: #{tpu_custom_call.1} parent=1 // pred_check
      _
    $region35: #{tpu_custom_call.1} parent=1 // pred_check_branch
      %51 = sbr.rel (0) target = $region37
    $region36: #{tpu_custom_call.1} parent=1 // pred_region
      %52 = dma.done [#allocation6], 16
    $region37: #{tpu_custom_call.1} parent=1 // pred_fallthru
      _
    %v54 = vld [vmem:[%s0] sm:$0xff]
    %v55 = vpack.c.bf16 %v54, %v54
    %v56 = vld [vmem:[#allocation2] sm:$0xf]
    %v57 = vld [vmem:[#allocation2 + $0x4] sm:$0xf]
    %v58 = vld [vmem:[%s2] sm:$0x1]
    %v60 = vlaneseq
    %v61 = vshrl.u32 %v60, 7
    %v62 = vsub.s32 0, %v61
    %v63 = vrot.slane %v58, %v62
    %v67 = vunpack.c.l.b16 %v56
    %v68 = vunpack.c.l.b16 %v57
    %v69 = vpack.c.b16 %v68, %v67
    %vm71 = vcmask 130048
    %v73 = vsel %vm71, %v55, 0
    %75 = vmatprep.subr.bf16.mxu0 0
    %76 = vmatpush1.bf16.msra.mxu0 0
    %77 = vmatprep.subr.bf16.mxu0 0
    %78 = vmatpush1.bf16.msra.mxu0 0
    %79 = vmatprep.subr.bf16.mxu0 0
    %80 = vmatpush1.bf16.msra.mxu0 0
    %81 = vmatprep.subr.bf16.mxu0 0
    %82 = vmatpush1.bf16.msra.mxu0 0
    %83 = vmatprep.subr.bf16.mxu0 0
    %84 = vmatpush1.bf16.msra.mxu0 0
    %85 = vmatprep.subr.bf16.mxu0 0
    %86 = vmatpush1.bf16.msra.mxu0 0
    %87 = vmatprep.subr.bf16.mxu0 0
    %88 = vmatpush1.bf16.msra.mxu0 0
    %89 = vmatprep.subr.bf16.mxu0 0
    %90 = vmatpush1.bf16.msra.mxu0 %v69
    %91 = vmatprep.subr.bf16.mxu0 0
    %92 = vmatpush2.bf16.msra.mxu0 0
    %93 = vmatprep.subr.bf16.mxu0 0
    %94 = vmatpush2.bf16.msra.mxu0 0
    %95 = vmatprep.subr.bf16.mxu0 0
    %96 = vmatpush2.bf16.msra.mxu0 0
    %97 = vmatprep.subr.bf16.mxu0 0
    %98 = vmatpush2.bf16.msra.mxu0 0
    %99 = vmatprep.subr.bf16.mxu0 0
    %100 = vmatpush2.bf16.msra.mxu0 0
    %101 = vmatprep.subr.bf16.mxu0 0
    %102 = vmatpush2.bf16.msra.mxu0 0
    %103 = vmatprep.subr.bf16.mxu0 0
    %104 = vmatpush2.bf16.msra.mxu0 0
    %105 = vmatprep.subr.bf16.mxu0 0
    %106 = vmatpush2.bf16.msra.mxu0 0
    %107 = vmatprep.mubr.bf16.mxu0 0
    %108 = vmatmul.mubr.bf16.gmra.mxu0 %v73
    %v109 = vpop.f32.mrf.mxu0
    %v110 = vadd.f32 %v63, %v109
    %v111 = vpop.f32.mrf.mxu0
    %v112 = vpop.f32.mrf.mxu0
    %v113 = vpop.f32.mrf.mxu0
    %114 = vdwg.mxu0
    %v115 = vmax.f32 %v110, 0.0
    %v116 = vpack.c.bf16 %v115, %v115
    %v117 = vld [vmem:[%s3] sm:$0xf]
    %v118 = vld [vmem:[%s3 + $0x4] sm:$0xf]
    %v119 = vld [vmem:[%s3 + $0x8] sm:$0xf]
    %v120 = vld [vmem:[%s3 + $0xc] sm:$0xf]
    %v121 = vld [vmem:[%s3 + $0x10] sm:$0xf]
    %v122 = vld [vmem:[%s3 + $0x14] sm:$0xf]
    %v123 = vld [vmem:[%s3 + $0x18] sm:$0xf]
    %v124 = vld [vmem:[%s3 + $0x1c] sm:$0xf]
    %v125 = vld [vmem:[%s3 + $0x20] sm:$0xf]
    %v126 = vld [vmem:[%s3 + $0x24] sm:$0xf]
    %v127 = vld [vmem:[%s3 + $0x28] sm:$0xf]
    %v128 = vld [vmem:[%s3 + $0x2c] sm:$0xf]
    %v129 = vld [vmem:[%s3 + $0x30] sm:$0xf]
    %v130 = vld [vmem:[%s3 + $0x34] sm:$0xf]
    %v131 = vld [vmem:[%s3 + $0x38] sm:$0xf]
    %v132 = vld [vmem:[%s3 + $0x3c] sm:$0xf]
    %v133 = vld [vmem:[#allocation5] sm:$0x1]
    %v135 = vlaneseq
    %v136 = vshrl.u32 %v135, 7
    %v137 = vsub.s32 0, %v136
    %v138 = vrot.slane %v133, %v137
    %v156 = vunpack.c.l.b16 %v117
    %v157 = vunpack.c.l.b16 %v118
    %v158 = vunpack.c.l.b16 %v119
    %v159 = vunpack.c.l.b16 %v120
    %v160 = vunpack.c.l.b16 %v121
    %v161 = vunpack.c.l.b16 %v122
    %v162 = vunpack.c.l.b16 %v123
    %v163 = vunpack.c.l.b16 %v124
    %v164 = vunpack.c.l.b16 %v125
    %v165 = vunpack.c.l.b16 %v126
    %v166 = vunpack.c.l.b16 %v127
    %v167 = vunpack.c.l.b16 %v128
    %v168 = vunpack.c.l.b16 %v129
    %v169 = vunpack.c.l.b16 %v130
    %v170 = vunpack.c.l.b16 %v131
    %v171 = vunpack.c.l.b16 %v132
    %v172 = vpack.c.b16 %v157, %v156
    %v173 = vpack.c.b16 %v159, %v158
    %v174 = vpack.c.b16 %v161, %v160
    %v175 = vpack.c.b16 %v163, %v162
    %v176 = vpack.c.b16 %v165, %v164
    %v177 = vpack.c.b16 %v167, %v166
    %v178 = vpack.c.b16 %v169, %v168
    %v179 = vpack.c.b16 %v171, %v170
    %188 = vmatprep.subr.bf16.mxu0 0
    %189 = vmatpush1.bf16.msra.mxu0 %v179
    %190 = vmatprep.subr.bf16.mxu0 0
    %191 = vmatpush1.bf16.msra.mxu0 %v178
    %192 = vmatprep.subr.bf16.mxu0 0
    %193 = vmatpush1.bf16.msra.mxu0 %v177
    %194 = vmatprep.subr.bf16.mxu0 0
    %195 = vmatpush1.bf16.msra.mxu0 %v176
    %196 = vmatprep.subr.bf16.mxu0 0
    %197 = vmatpush1.bf16.msra.mxu0 %v175
    %198 = vmatprep.subr.bf16.mxu0 0
    %199 = vmatpush1.bf16.msra.mxu0 %v174
    %200 = vmatprep.subr.bf16.mxu0 0
    %201 = vmatpush1.bf16.msra.mxu0 %v173
    %202 = vmatprep.subr.bf16.mxu0 0
    %203 = vmatpush1.bf16.msra.mxu0 %v172
    %204 = vmatprep.subr.bf16.mxu0 0
    %205 = vmatpush2.bf16.msra.mxu0 0
    %206 = vmatprep.subr.bf16.mxu0 0
    %207 = vmatpush2.bf16.msra.mxu0 0
    %208 = vmatprep.subr.bf16.mxu0 0
    %209 = vmatpush2.bf16.msra.mxu0 0
    %210 = vmatprep.subr.bf16.mxu0 0
    %211 = vmatpush2.bf16.msra.mxu0 0
    %212 = vmatprep.subr.bf16.mxu0 0
    %213 = vmatpush2.bf16.msra.mxu0 0
    %214 = vmatprep.subr.bf16.mxu0 0
    %215 = vmatpush2.bf16.msra.mxu0 0
    %216 = vmatprep.subr.bf16.mxu0 0
    %217 = vmatpush2.bf16.msra.mxu0 0
    %218 = vmatprep.subr.bf16.mxu0 0
    %219 = vmatpush2.bf16.msra.mxu0 0
    %220 = vmatprep.mubr.bf16.mxu0 0
    %221 = vmatmul.mubr.bf16.gmra.mxu0 %v116
    %v222 = vpop.f32.mrf.mxu0
    %v223 = vadd.f32 %v138, %v222
    %v224 = vpop.f32.mrf.mxu0
    %v225 = vpop.f32.mrf.mxu0
    %v226 = vpop.f32.mrf.mxu0
    %227 = vdwg.mxu0
    %v228 = vmax.f32 %v223, 0.0
    %v229 = vpack.c.bf16 %v228, %v228
    %v230 = vld [vmem:[%s5] sm:$0xf]
    %v231 = vld [vmem:[%s5 + $0x4] sm:$0xf]
    %v232 = vld [vmem:[%s5 + $0x8] sm:$0xf]
    %v233 = vld [vmem:[%s5 + $0xc] sm:$0xf]
    %v234 = vld [vmem:[%s5 + $0x10] sm:$0xf]
    %v235 = vld [vmem:[%s5 + $0x14] sm:$0xf]
    %v236 = vld [vmem:[%s5 + $0x18] sm:$0xf]
    %v237 = vld [vmem:[%s5 + $0x1c] sm:$0xf]
    %v238 = vld [vmem:[%s5 + $0x20] sm:$0xf]
    %v239 = vld [vmem:[%s5 + $0x24] sm:$0xf]
    %v240 = vld [vmem:[%s5 + $0x28] sm:$0xf]
    %v241 = vld [vmem:[%s5 + $0x2c] sm:$0xf]
    %v242 = vld [vmem:[%s5 + $0x30] sm:$0xf]
    %v243 = vld [vmem:[%s5 + $0x34] sm:$0xf]
    %v244 = vld [vmem:[%s5 + $0x38] sm:$0xf]
    %v245 = vld [vmem:[%s5 + $0x3c] sm:$0xf]
    %v246 = vld [vmem:[%s6] sm:$0x1]
    %v248 = vlaneseq
    %v249 = vshrl.u32 %v248, 7
    %v250 = vsub.s32 0, %v249
    %v251 = vrot.slane %v246, %v250
    %v269 = vunpack.c.l.b16 %v230
    %v270 = vunpack.c.l.b16 %v231
    %v271 = vunpack.c.l.b16 %v232
    %v272 = vunpack.c.l.b16 %v233
    %v273 = vunpack.c.l.b16 %v234
    %v274 = vunpack.c.l.b16 %v235
    %v275 = vunpack.c.l.b16 %v236
    %v276 = vunpack.c.l.b16 %v237
    %v277 = vunpack.c.l.b16 %v238
    %v278 = vunpack.c.l.b16 %v239
    %v279 = vunpack.c.l.b16 %v240
    %v280 = vunpack.c.l.b16 %v241
    %v281 = vunpack.c.l.b16 %v242
    %v282 = vunpack.c.l.b16 %v243
    %v283 = vunpack.c.l.b16 %v244
    %v284 = vunpack.c.l.b16 %v245
    %v285 = vpack.c.b16 %v270, %v269
    %v286 = vpack.c.b16 %v272, %v271
    %v287 = vpack.c.b16 %v274, %v273
    %v288 = vpack.c.b16 %v276, %v275
    %v289 = vpack.c.b16 %v278, %v277
    %v290 = vpack.c.b16 %v280, %v279
    %v291 = vpack.c.b16 %v282, %v281
    %v292 = vpack.c.b16 %v284, %v283
    %301 = vmatprep.subr.bf16.mxu0 0
    %302 = vmatpush1.bf16.msra.mxu0 %v292
    %303 = vmatprep.subr.bf16.mxu0 0
    %304 = vmatpush1.bf16.msra.mxu0 %v291
    %305 = vmatprep.subr.bf16.mxu0 0
    %306 = vmatpush1.bf16.msra.mxu0 %v290
    %307 = vmatprep.subr.bf16.mxu0 0
    %308 = vmatpush1.bf16.msra.mxu0 %v289
    %309 = vmatprep.subr.bf16.mxu0 0
    %310 = vmatpush1.bf16.msra.mxu0 %v288
    %311 = vmatprep.subr.bf16.mxu0 0
    %312 = vmatpush1.bf16.msra.mxu0 %v287
    %313 = vmatprep.subr.bf16.mxu0 0
    %314 = vmatpush1.bf16.msra.mxu0 %v286
    %315 = vmatprep.subr.bf16.mxu0 0
    %316 = vmatpush1.bf16.msra.mxu0 %v285
    %317 = vmatprep.subr.bf16.mxu0 0
    %318 = vmatpush2.bf16.msra.mxu0 0
    %319 = vmatprep.subr.bf16.mxu0 0
    %320 = vmatpush2.bf16.msra.mxu0 0
    %321 = vmatprep.subr.bf16.mxu0 0
    %322 = vmatpush2.bf16.msra.mxu0 0
    %323 = vmatprep.subr.bf16.mxu0 0
    %324 = vmatpush2.bf16.msra.mxu0 0
    %325 = vmatprep.subr.bf16.mxu0 0
    %326 = vmatpush2.bf16.msra.mxu0 0
    %327 = vmatprep.subr.bf16.mxu0 0
    %328 = vmatpush2.bf16.msra.mxu0 0
    %329 = vmatprep.subr.bf16.mxu0 0
    %330 = vmatpush2.bf16.msra.mxu0 0
    %331 = vmatprep.subr.bf16.mxu0 0
    %332 = vmatpush2.bf16.msra.mxu0 0
    %333 = vmatprep.mubr.bf16.mxu0 0
    %334 = vmatmul.mubr.bf16.gmra.mxu0 %v229
    %v335 = vpop.f32.mrf.mxu0
    %v336 = vadd.f32 %v251, %v335
    %v337 = vpop.f32.mrf.mxu0
    %v338 = vpop.f32.mrf.mxu0
    %v339 = vpop.f32.mrf.mxu0
    %340 = vdwg.mxu0
    %vm341 = vcmask 64512
    %342 = vst.msk [vmem:[#allocation7] sm:$0xff] %vm341, %v336
    // Predicated region
    $region38: #{tpu_custom_call.1} parent=1 // pred_check
      _
    $region39: #{tpu_custom_call.1} parent=1 // pred_check_branch
      %344 = sbr.rel (0) target = $region41
    $region40: #{tpu_custom_call.1} parent=1 // pred_region
      %s346 = ssub.s32 128, 128
      %347 = vsyncadd [#allocation4], %s346
      %s349 = sshll.u32 [#allocation7], 4
      %s350 = int_to_ptr.vmem [resolvable:$true] %s349
      %352 = dma.vmem_to_hbm [thread:$0]  %s350, 128, %s7, [#allocation4]
    $region41: #{tpu_custom_call.1} parent=1 // pred_fallthru
      _
    // Predicated region
    $region42: #{tpu_custom_call.1} parent=1 // pred_check
      _
    $region43: #{tpu_custom_call.1} parent=1 // pred_check_branch
      %354 = sbr.rel (0) target = $region45
    $region44: #{tpu_custom_call.1} parent=1 // pred_region
      %355 = dma.done [#allocation4], 128
    $region45: #{tpu_custom_call.1} parent=1 // pred_fallthru
      _
    %356 = vsyncpa [#allocation3], 1
    %357 = vsyncpa [#allocation6], 1
    %358 = vsyncpa [#allocation4], 1

</llo_original>
